<compile_context>
chip_gen: v6e
topology: v6e:2x2x1
jax: 0.10.0
libtpu: 0.0.40
codegen_flags: <defaults>
</compile_context>

<pallas_src>
import functools

import jax
import jax.numpy as jnp
from jax.experimental import pallas as pl
from jax.experimental.pallas import tpu as pltpu

_VMEM_LIMIT = 32 * 1024 * 1024  # fits v5e/v6e/v7x; our worst kernel needs ~13 MB


# -----------------------------------------------------------------------------
# tiling helpers
# -----------------------------------------------------------------------------
def _round_up(x, m):
    return ((x + m - 1) // m) * m


def _pick_tile(dim, target, align):
    """Largest multiple of `align` that divides `dim` and is <= target, else dim.

    Note: the vocab dimension is pre-padded at init to a multiple of its tile,
    so the full-dim fallback never triggers on the (huge) vocab axis."""
    if dim <= target:
        return dim
    t = (target // align) * align
    while t >= align:
        if dim % t == 0:
            return t
        t -= align
    return dim


# -----------------------------------------------------------------------------
# linear: out = act(x @ W + b), tiled M/N/K with f32 accumulator
# -----------------------------------------------------------------------------
def _linear_kernel(act, x_ref, w_ref, b_ref, o_ref, acc_ref):
    k = pl.program_id(2)

    @pl.when(k == 0)
    def _():
        acc_ref[...] = jnp.zeros_like(acc_ref)

    acc_ref[...] += jnp.dot(x_ref[...], w_ref[...],
                            preferred_element_type=jnp.float32)

    @pl.when(k == pl.num_programs(2) - 1)
    def _():
        y = acc_ref[...] + b_ref[...].astype(jnp.float32)
        if act == "relu":
            y = jnp.maximum(y, 0.0)
        elif act == "gelu":
            # exact (erf) GELU, matching torch.nn.functional.gelu default
            # TODO(synk): on v5e consider tanh-approx GELU (EUP) if the erf
            # polynomial shows on the critical path and the tolerance allows.
            y = jax.nn.gelu(y, approximate=False)
        o_ref[...] = y.astype(o_ref.dtype)


def linear(x, w, b, act="none", out_dtype=jnp.bfloat16):
    M, K = x.shape
    _, N = w.shape
    tm = _pick_tile(M, 512, 8)
    tn = _pick_tile(N, 1024, 128)
    tk = _pick_tile(K, 1024, 128)
    return pl.pallas_call(
        functools.partial(_linear_kernel, act),
        out_shape=jax.ShapeDtypeStruct((M, N), out_dtype),
        grid=(M // tm, N // tn, K // tk),
        in_specs=[
            pl.BlockSpec((tm, tk), lambda i, j, k: (i, k)),
            pl.BlockSpec((tk, tn), lambda i, j, k: (k, j)),
            pl.BlockSpec((1, tn), lambda i, j, k: (0, j)),
        ],
        out_specs=pl.BlockSpec((tm, tn), lambda i, j, k: (i, j)),
        scratch_shapes=[pltpu.VMEM((tm, tn), jnp.float32)],
        compiler_params=pltpu.CompilerParams(
            dimension_semantics=("parallel", "parallel", "arbitrary"),
            vmem_limit_bytes=_VMEM_LIMIT),
    )(x.astype(jnp.bfloat16), w.astype(jnp.bfloat16),
      b.reshape(1, N).astype(jnp.float32))


# -----------------------------------------------------------------------------
# linear_add_ln: out = LayerNorm(resid + x @ W + b) * g + beta   (full-N block)
# -----------------------------------------------------------------------------
def _linear_add_ln_kernel(eps, x_ref, w_ref, b_ref, r_ref, g_ref, bb_ref,
                          o_ref, acc_ref):
    k = pl.program_id(1)

    @pl.when(k == 0)
    def _():
        acc_ref[...] = jnp.zeros_like(acc_ref)

    acc_ref[...] += jnp.dot(x_ref[...], w_ref[...],
                            preferred_element_type=jnp.float32)

    @pl.when(k == pl.num_programs(1) - 1)
    def _():
        y = (acc_ref[...] + b_ref[...].astype(jnp.float32)
             + r_ref[...].astype(jnp.float32))
        mu = jnp.mean(y, axis=-1, keepdims=True)
        var = jnp.mean((y - mu) ** 2, axis=-1, keepdims=True)
        yn = (y - mu) * jax.lax.rsqrt(var + eps)
        o_ref[...] = (yn * g_ref[...].astype(jnp.float32)
                      + bb_ref[...].astype(jnp.float32)).astype(o_ref.dtype)


def linear_add_ln(x, w, b, resid, gamma, beta, eps=1e-5, out_dtype=jnp.bfloat16):
    M, K = x.shape
    _, N = w.shape
    tm = _pick_tile(M, 512, 8)
    tk = _pick_tile(K, 1024, 128)
    return pl.pallas_call(
        functools.partial(_linear_add_ln_kernel, eps),
        out_shape=jax.ShapeDtypeStruct((M, N), out_dtype),
        grid=(M // tm, K // tk),
        in_specs=[
            pl.BlockSpec((tm, tk), lambda i, k: (i, k)),
            pl.BlockSpec((tk, N), lambda i, k: (k, 0)),
            pl.BlockSpec((1, N), lambda i, k: (0, 0)),
            pl.BlockSpec((tm, N), lambda i, k: (i, 0)),
            pl.BlockSpec((1, N), lambda i, k: (0, 0)),
            pl.BlockSpec((1, N), lambda i, k: (0, 0)),
        ],
        out_specs=pl.BlockSpec((tm, N), lambda i, k: (i, 0)),
        scratch_shapes=[pltpu.VMEM((tm, N), jnp.float32)],
        compiler_params=pltpu.CompilerParams(
            dimension_semantics=("parallel", "arbitrary"),
            vmem_limit_bytes=_VMEM_LIMIT),
    )(x.astype(jnp.bfloat16), w.astype(jnp.bfloat16),
      b.reshape(1, N).astype(jnp.float32),
      resid,
      gamma.reshape(1, N).astype(jnp.float32),
      beta.reshape(1, N).astype(jnp.float32))


# -----------------------------------------------------------------------------
# standalone layernorm (embedding LN only)
# -----------------------------------------------------------------------------
def _layernorm_kernel(eps, x_ref, g_ref, b_ref, o_ref):
    x = x_ref[...].astype(jnp.float32)
    mu = jnp.mean(x, axis=-1, keepdims=True)
    var = jnp.mean((x - mu) ** 2, axis=-1, keepdims=True)
    y = (x - mu) * jax.lax.rsqrt(var + eps)
    o_ref[...] = (y * g_ref[...].astype(jnp.float32)
                  + b_ref[...].astype(jnp.float32)).astype(o_ref.dtype)


def layernorm(x, g, b, eps=1e-5, out_dtype=jnp.bfloat16):
    M, D = x.shape
    tm = _pick_tile(M, 512, 8)
    return pl.pallas_call(
        functools.partial(_layernorm_kernel, eps),
        out_shape=jax.ShapeDtypeStruct((M, D), out_dtype),
        grid=(M // tm,),
        in_specs=[
            pl.BlockSpec((tm, D), lambda i: (i, 0)),
            pl.BlockSpec((1, D), lambda i: (0, 0)),
            pl.BlockSpec((1, D), lambda i: (0, 0)),
        ],
        out_specs=pl.BlockSpec((tm, D), lambda i: (i, 0)),
        compiler_params=pltpu.CompilerParams(dimension_semantics=("parallel",)),
    )(x, g.reshape(1, D).astype(jnp.float32), b.reshape(1, D).astype(jnp.float32))


# -----------------------------------------------------------------------------
# attention: packed QKV / KV stay lane-dense; heads split in-kernel; output is
# written directly in (B, T, d) layout (no HBM head transposes anywhere).
# -----------------------------------------------------------------------------
def _attn_heads(q, k, v, nheads, causal, o_ref):
    """q:(Tq,d) bf16 (already scaled by Dh^-0.5), k/v:(Tk,d) bf16.
    Writes softmax(q kᵀ) v per head into the lane-dense (Tq, d) output block."""
    tq, d = q.shape
    tk = k.shape[0]
    dh = d // nheads
    if causal:
        # 2-D additive mask, built once and reused by every head
        row = jax.lax.broadcasted_iota(jnp.int32, (tq, tk), 0)
        col = jax.lax.broadcasted_iota(jnp.int32, (tq, tk), 1)
        neg = jnp.where(col <= row, 0.0, -1e30).astype(jnp.float32)
    # TODO(synk): for long sequences switch to a flash-style online-softmax with
    # a (B, H) grid and KV-tile axis; for caption-length T everything fits VMEM.
    for h in range(nheads):
        sl = slice(h * dh, (h + 1) * dh)
        s = jax.lax.dot_general(q[:, sl], k[:, sl], (((1,), (1,)), ((), ())),
                                preferred_element_type=jnp.float32)  # (Tq, Tk)
        if causal:
            s = s + neg
        m = jnp.max(s, axis=-1, keepdims=True)
        p = jnp.exp(s - m)
        denom = jnp.sum(p, axis=-1, keepdims=True)
        pv = jnp.dot(p.astype(v.dtype), v[:, sl],
                     preferred_element_type=jnp.float32)             # (Tq, Dh)
        o_ref[:, sl] = (pv * pl.reciprocal(denom, approx=False)).astype(o_ref.dtype)


def _self_attn_kernel(nheads, scale, d, qkv_ref, o_ref):
    # qkv_ref: (T, 3d) packed [q | k | v]; scale folded into q in bf16
    q = qkv_ref[:, 0:d] * scale
    k = qkv_ref[:, d:2 * d]
    v = qkv_ref[:, 2 * d:3 * d]
    _attn_heads(q, k, v, nheads, True, o_ref)


def _cross_attn_kernel(nheads, scale, d, q_ref, kv_ref, o_ref):
    q = q_ref[...] * scale
    k = kv_ref[:, 0:d]
    v = kv_ref[:, d:2 * d]
    _attn_heads(q, k, v, nheads, False, o_ref)


def self_attention(qkv, heads):
    """qkv: (B, T, 3*d) packed [q|k|v] -> (B, T, d), causal."""
    B, T, d3 = qkv.shape
    d = d3 // 3
    scale = (d // heads) ** -0.5
    return pl.pallas_call(
        functools.partial(_self_attn_kernel, heads, scale, d),
        out_shape=jax.ShapeDtypeStruct((B, T, d), jnp.bfloat16),
        grid=(B,),
        in_specs=[pl.BlockSpec((None, T, d3), lambda b: (b, 0, 0))],
        out_specs=pl.BlockSpec((None, T, d), lambda b: (b, 0, 0)),
        compiler_params=pltpu.CompilerParams(dimension_semantics=("parallel",)),
    )(qkv)


def cross_attention(q, kv, heads):
    """q: (B, Tq, d), kv: (B, Tk, 2*d) packed [k|v] -> (B, Tq, d), unmasked."""
    B, Tq, d = q.shape
    Tk = kv.shape[1]
    scale = (d // heads) ** -0.5
    return pl.pallas_call(
        functools.partial(_cross_attn_kernel, heads, scale, d),
        out_shape=jax.ShapeDtypeStruct((B, Tq, d), jnp.bfloat16),
        grid=(B,),
        in_specs=[pl.BlockSpec((None, Tq, d), lambda b: (b, 0, 0)),
                  pl.BlockSpec((None, Tk, 2 * d), lambda b: (b, 0, 0))],
        out_specs=pl.BlockSpec((None, Tq, d), lambda b: (b, 0, 0)),
        compiler_params=pltpu.CompilerParams(dimension_semantics=("parallel",)),
    )(q, kv)


# -----------------------------------------------------------------------------
# fused tied lm_head + cross-entropy (online logsumexp over 512-wide vocab tiles;
# vocab is pre-padded so tiling never degenerates; logits written once as bf16)
# -----------------------------------------------------------------------------
def _lmhead_ce_kernel(x_ref, w_ref, b_ref, lab_ref, logits_ref, loss_ref,
                      acc_ref, m_ref, s_ref, pick_ref):
    j = pl.program_id(1)
    k = pl.program_id(2)
    nj = pl.num_programs(1)
    nk = pl.num_programs(2)

    @pl.when(k == 0)
    def _():
        acc_ref[...] = jnp.zeros_like(acc_ref)

    # tied lm_head: contract against the (V, d) embedding layout (RHS transposed)
    # TODO(synk): if the bundle dump shows vxpose on this feed, trade one extra
    # HBM pass for a pre-transposed (d, V) table copy kept in params.
    acc_ref[...] += jax.lax.dot_general(
        x_ref[...], w_ref[...], (((1,), (1,)), ((), ())),
        preferred_element_type=jnp.float32)

    @pl.when(jnp.logical_and(k == nk - 1, j == 0))
    def _():
        m_ref[...] = jnp.full_like(m_ref, -jnp.inf)
        s_ref[...] = jnp.zeros_like(s_ref)
        pick_ref[...] = jnp.zeros_like(pick_ref)

    @pl.when(k == nk - 1)
    def _():
        # padded vocab columns carry bias = -1e30 -> exp(.) == 0, excluded below
        logits = acc_ref[...] + b_ref[...].astype(jnp.float32)   # (tm, tv) f32
        logits_ref[...] = logits.astype(logits_ref.dtype)        # bf16 store
        tile_max = jnp.max(logits, axis=-1, keepdims=True)
        new_m = jnp.maximum(m_ref[...], tile_max)
        s_ref[...] = (s_ref[...] * jnp.exp(m_ref[...] - new_m)
                      + jnp.sum(jnp.exp(logits - new_m), axis=-1, keepdims=True))
        m_ref[...] = new_m
        tm_, tv_ = logits.shape
        col = jax.lax.broadcasted_iota(jnp.int32, (tm_, tv_), 1) + j * tv_
        pick_ref[...] += jnp.sum(jnp.where(col == lab_ref[...], logits, 0.0),
                                 axis=-1, keepdims=True)

    @pl.when(jnp.logical_and(k == nk - 1, j == nj - 1))
    def _():
        lse = m_ref[...] + jnp.log(s_ref[...])
        valid = (lab_ref[...] >= 0).astype(jnp.float32)   # ignore_index semantics
        loss_ref[...] = (lse - pick_ref[...]) * valid


def lm_head_cross_entropy(h, embed_tokens_padded, bias_padded, labels, vocab):
    """Fused tied lm_head + token CE over the padded vocab.
    Returns (mean_loss, logits[M, vocab] bf16)."""
    M, D = h.shape
    Vp, _ = embed_tokens_padded.shape
    # large row tiles -> the (Vp, D) table is re-streamed from HBM as few times
    # as possible; M // tm >= 2 when M is big enough so v7x keeps both TCs busy.
    tm = _pick_tile(M, min(1024, max(256, M // 2)), 8)
    tv = _pick_tile(Vp, 512, 128)
    tk = _pick_tile(D, 1024, 128)
    labels2d = labels.reshape(M, 1).astype(jnp.int32)

    # TODO(synk): on v5e consider pipeline_mode=pl.Buffered(3) on the table spec.
    logits_p, loss_rows = pl.pallas_call(
        _lmhead_ce_kernel,
        out_shape=(jax.ShapeDtypeStruct((M, Vp), jnp.bfloat16),
                   jax.ShapeDtypeStruct((M, 1), jnp.float32)),
        grid=(M // tm, Vp // tv, D // tk),
        in_specs=[
            pl.BlockSpec((tm, tk), lambda i, j, k: (i, k)),   # hidden states
            pl.BlockSpec((tv, tk), lambda i, j, k: (j, k)),   # embed table (Vp,d)
            pl.BlockSpec((1, tv), lambda i, j, k: (0, j)),    # final_logits_bias
            pl.BlockSpec((tm, 1), lambda i, j, k: (i, 0)),    # labels
        ],
        out_specs=(pl.BlockSpec((tm, tv), lambda i, j, k: (i, j)),
                   pl.BlockSpec((tm, 1), lambda i, j, k: (i, 0))),
        scratch_shapes=[pltpu.VMEM((tm, tv), jnp.float32),   # logits accumulator
                        pltpu.VMEM((tm, 1), jnp.float32),    # running max
                        pltpu.VMEM((tm, 1), jnp.float32),    # running sum
                        pltpu.VMEM((tm, 1), jnp.float32)],   # picked logit
        compiler_params=pltpu.CompilerParams(
            dimension_semantics=("parallel", "arbitrary", "arbitrary"),
            vmem_limit_bytes=_VMEM_LIMIT),
    )(h.astype(jnp.bfloat16), embed_tokens_padded.astype(jnp.bfloat16),
      bias_padded.reshape(1, Vp).astype(jnp.float32), labels2d)

    # final mean over valid tokens: tiny, done in plain JAX
    valid = (labels >= 0).astype(jnp.float32)
    loss = jnp.sum(loss_rows) / jnp.maximum(jnp.sum(valid), 1.0)
    logits = logits_p[:, :vocab] if Vp != vocab else logits_p
    return loss, logits


# -----------------------------------------------------------------------------
# parameter init + forward graph (all heavy compute in the kernels above)
# -----------------------------------------------------------------------------
def init_params(key, cfg, f_in, t_dec):
    d, V, ffn = cfg["d_model"], cfg["vocab"], cfg["ffn"]
    keys = iter(jax.random.split(key, 512))

    def w(shape, std=0.02):
        return (jax.random.normal(next(keys), shape, jnp.float32) * std
                ).astype(jnp.bfloat16)

    def zeros(n):
        return jnp.zeros((n,), jnp.float32)

    p = {}
    # TODO(synk): OpenL3Embeddings is a CNN whose weights are loaded from a checkpoint
    # in the original module; here it is a deterministic dense stand-in producing the
    # same 300-d audio embedding.
    p["audio_enc_w"] = w((f_in, cfg["audio_emb"]))
    p["audio_enc_b"] = zeros(cfg["audio_emb"])

    # audio_adapt: Linear(300, d) [, ReLU, Linear(d, d)] * (n_adapt-1)
    dims = [cfg["audio_emb"]] + [d] * cfg["n_adapt"]
    p["adapt"] = [(w((dims[i], dims[i + 1])), zeros(dims[i + 1]))
                  for i in range(cfg["n_adapt"])]

    # tied embedding table, padded once to a multiple of the vocab tile so the
    # lm_head kernel always sweeps lane-aligned vocab tiles (pad rows are zero
    # and pad bias is -1e30 -> padded columns never contribute to CE).
    Vp = _round_up(V, 512) if V > 512 else _round_up(V, 128)
    emb = w((V, d))
    flb = zeros(V)
    if Vp != V:
        emb = jnp.concatenate([emb, jnp.zeros((Vp - V, d), emb.dtype)], axis=0)
        flb = jnp.concatenate([flb, jnp.full((Vp - V,), -1e30, jnp.float32)])
    p["embed_tokens"] = emb                     # (Vp, d)
    p["final_logits_bias"] = flb                # (Vp,)

    p["embed_positions"] = w((t_dec + 2, d))    # learned positions, BART offset 2
    p["ln_emb"] = (jnp.ones((d,), jnp.float32), zeros(d))

    layers = []
    for _ in range(cfg["dec_layers"]):
        L = {
            "sa_qkv": (w((d, 3 * d)), zeros(3 * d)),   # fused Q/K/V projection
            "sa_o": (w((d, d)), zeros(d)),
            "sa_ln": (jnp.ones((d,), jnp.float32), zeros(d)),
            "ca_q": (w((d, d)), zeros(d)),
            "ca_kv": (w((d, 2 * d)), zeros(2 * d)),    # fused K/V projection
            "ca_o": (w((d, d)), zeros(d)),
            "ca_ln": (jnp.ones((d,), jnp.float32), zeros(d)),
            "fc1": (w((d, ffn)), zeros(ffn)),
            "fc2": (w((ffn, d)), zeros(d)),
            "fin_ln": (jnp.ones((d,), jnp.float32), zeros(d)),
        }
        layers.append(L)
    p["layers"] = layers
    return p


def bartaac_forward(params, audio_features, decoder_input_ids, labels, cfg):
    B, Tenc, Fin = audio_features.shape
    Tdec = decoder_input_ids.shape[1]
    d, H, V = cfg["d_model"], cfg["heads"], cfg["vocab"]

    # ---- audio encoder stand-in (OpenL3, out_dim=300) ----
    a = linear(audio_features.reshape(B * Tenc, Fin),
               params["audio_enc_w"], params["audio_enc_b"])

    # ---- audio adapter: Linear -> (ReLU -> Linear)* ----
    n_adapt = len(params["adapt"])
    for i, (wi, bi) in enumerate(params["adapt"]):
        a = linear(a, wi, bi, act="relu" if i < n_adapt - 1 else "none")
    enc2d = a                                    # (B*Tenc, d) == encoder_outputs[0]

    # ---- BART decoder (post-LayerNorm, eval mode: dropout is identity) ----
    emb = params["embed_tokens"][decoder_input_ids]          # token gather (glue)
    pos = params["embed_positions"][2:2 + Tdec]              # offset-2 learned pos
    h = (emb + pos[None, :, :]).reshape(B * Tdec, d)
    h = layernorm(h, *params["ln_emb"])                      # (B*Tdec, d) bf16

    for L in params["layers"]:
        # -- causal self-attention: fused QKV matmul, packed lane-dense layout --
        qkv = linear(h, *L["sa_qkv"]).reshape(B, Tdec, 3 * d)   # free reshape
        o = self_attention(qkv, H).reshape(B * Tdec, d)
        h = linear_add_ln(o, *L["sa_o"], h, *L["sa_ln"])        # out-proj+resid+LN

        # -- cross-attention over audio embeddings: fused KV matmul --
        q = linear(h, *L["ca_q"]).reshape(B, Tdec, d)
        kv = linear(enc2d, *L["ca_kv"]).reshape(B, Tenc, 2 * d)
        o = cross_attention(q, kv, H).reshape(B * Tdec, d)
        h = linear_add_ln(o, *L["ca_o"], h, *L["ca_ln"])

        # -- feed-forward (exact GELU); fc2 fused with residual + LN --
        f = linear(h, *L["fc1"], act="gelu")
        h = linear_add_ln(f, *L["fc2"], h, *L["fin_ln"])

    # ---- tied lm_head + final_logits_bias fused with cross-entropy ----
    loss, logits = lm_head_cross_entropy(
        h, params["embed_tokens"], params["final_logits_bias"],
        labels.reshape(-1), V)
    return loss, logits.reshape(B, Tdec, V)


# -----------------------------------------------------------------------------
if __name__ == "__main__":
    cfg = dict(d_model=32, heads=2, ffn=64, vocab=128, dec_layers=2,
               audio_emb=300, n_adapt=2)
    B, T_ENC, F_IN = 2, 8, 48
    T_DEC = 8

    params = init_params(jax.random.PRNGKey(0), cfg, F_IN, T_DEC)

    k1, k2, k3 = jax.random.split(jax.random.PRNGKey(0), 3)
    audio_features = jax.random.normal(k1, (B, T_ENC, F_IN), jnp.float32)
    decoder_input_ids = jax.random.randint(k2, (B, T_DEC), 0, cfg["vocab"])
    labels = jax.random.randint(k3, (B, T_DEC), 0, cfg["vocab"])

    loss, logits = bartaac_forward(params, audio_features, decoder_input_ids,
                                   labels, cfg)
    jax.block_until_ready((loss, logits))
    assert logits.shape == (B, T_DEC, cfg["vocab"]) and loss.shape == ()
    print("KERNEL_OK")
</pallas_src>

<mosaic_0001>
module attributes {stable_mosaic.version = 11 : i64} {
  func.func @_linear_kernel(%arg0: i32, %arg1: i32, %arg2: i32, %arg3: memref<16x48xbf16, #tpu.memory_space<vmem>>, %arg4: memref<48x300xbf16, #tpu.memory_space<vmem>>, %arg5: memref<1x300xf32, #tpu.memory_space<vmem>>, %arg6: memref<16x300xbf16, #tpu.memory_space<vmem>>, %arg7: memref<16x300xf32, #tpu.memory_space<vmem>>) attributes {dimension_semantics = [#tpu.dimension_semantics<parallel>, #tpu.dimension_semantics<parallel>, #tpu.dimension_semantics<arbitrary>], iteration_bounds = array<i64: 1, 1, 1>, scalar_prefetch = 0 : i64, scratch_operands = 1 : i64, tpu.core_type = #tpu.core_type<tc>, window_params = [{transform_indices = @transform_0, window_bounds = array<i64: 16, 48>}, {transform_indices = @transform_1, window_bounds = array<i64: 48, 300>}, {transform_indices = @transform_2, window_bounds = array<i64: 1, 300>}, {transform_indices = @transform_3, window_bounds = array<i64: 16, 300>}]} {
    %c0_i32 = arith.constant 0 : i32
    %0 = arith.cmpi eq, %arg2, %c0_i32 : i32
    %1 = arith.extui %0 : i1 to i32
    %c0_i32_0 = arith.constant 0 : i32
    %2 = arith.cmpi ne, %1, %c0_i32_0 : i32
    scf.if %2 {
      %cst_10 = arith.constant 0.000000e+00 : f32
      %12 = vector.broadcast %cst_10 : f32 to vector<16x300xf32>
      %c0_11 = arith.constant 0 : index
      %c0_12 = arith.constant 0 : index
      %13 = vector.load %arg7[%c0_11, %c0_12] : memref<16x300xf32, #tpu.memory_space<vmem>>, vector<16x300xf32>
      tpu.vector_store %arg7[%c0_11, %c0_12], %12 {strides = array<i32>} : memref<16x300xf32, #tpu.memory_space<vmem>>, vector<16x300xf32>,
    } else {
    }
    %c0 = arith.constant 0 : index
    %c0_1 = arith.constant 0 : index
    %3 = vector.load %arg7[%c0, %c0_1] : memref<16x300xf32, #tpu.memory_space<vmem>>, vector<16x300xf32>
    %c0_2 = arith.constant 0 : index
    %c0_3 = arith.constant 0 : index
    %4 = vector.load %arg3[%c0_2, %c0_3] : memref<16x48xbf16, #tpu.memory_space<vmem>>, vector<16x48xbf16>
    %c0_4 = arith.constant 0 : index
    %c0_5 = arith.constant 0 : index
    %5 = vector.load %arg4[%c0_4, %c0_5] : memref<48x300xbf16, #tpu.memory_space<vmem>>, vector<48x300xbf16>
    %cst = arith.constant dense<0.000000e+00> : vector<16x300xf32>
    %6 = tpu.matmul %4, %5, %cst {dimension_numbers = #tpu.dot_dimension_numbers<[1], [0], [0], [1], [0, 0, 1, 1], [], []>} : vector<16x48xbf16>, vector<48x300xbf16>, vector<16x300xf32> -> vector<16x300xf32>
    %7 = arith.addf %3, %6 : vector<16x300xf32>
    %c0_6 = arith.constant 0 : index
    %c0_7 = arith.constant 0 : index
    %8 = vector.load %arg7[%c0_6, %c0_7] : memref<16x300xf32, #tpu.memory_space<vmem>>, vector<16x300xf32>
    tpu.vector_store %arg7[%c0_6, %c0_7], %7 {strides = array<i32>} : memref<16x300xf32, #tpu.memory_space<vmem>>, vector<16x300xf32>,
    %c0_i32_8 = arith.constant 0 : i32
    %9 = arith.cmpi eq, %arg2, %c0_i32_8 : i32
    %10 = arith.extui %9 : i1 to i32
    %c0_i32_9 = arith.constant 0 : i32
    %11 = arith.cmpi ne, %10, %c0_i32_9 : i32
    scf.if %11 {
      %c0_10 = arith.constant 0 : index
      %c0_11 = arith.constant 0 : index
      %12 = vector.load %arg7[%c0_10, %c0_11] : memref<16x300xf32, #tpu.memory_space<vmem>>, vector<16x300xf32>
      %c0_12 = arith.constant 0 : index
      %c0_13 = arith.constant 0 : index
      %13 = vector.load %arg5[%c0_12, %c0_13] : memref<1x300xf32, #tpu.memory_space<vmem>>, vector<1x300xf32>
      %14 = vector.broadcast %13 : vector<1x300xf32> to vector<16x300xf32>
      %15 = arith.addf %12, %14 : vector<16x300xf32>
      %16 = arith.truncf %15 : vector<16x300xf32> to vector<16x300xbf16>
      %c0_14 = arith.constant 0 : index
      %c0_15 = arith.constant 0 : index
      %17 = vector.load %arg6[%c0_14, %c0_15] : memref<16x300xbf16, #tpu.memory_space<vmem>>, vector<16x300xbf16>
      tpu.vector_store %arg6[%c0_14, %c0_15], %16 {strides = array<i32>} : memref<16x300xbf16, #tpu.memory_space<vmem>>, vector<16x300xbf16>,
    } else {
    }
    return
  }
  func.func @transform_0(%arg0: i32, %arg1: i32, %arg2: i32) -> (i32, i32) {
    %c0_i32 = arith.constant 0 : i32
    return %arg0, %arg2 : i32, i32
  }
  func.func @transform_1(%arg0: i32, %arg1: i32, %arg2: i32) -> (i32, i32) {
    %c0_i32 = arith.constant 0 : i32
    return %arg2, %arg1 : i32, i32
  }
  func.func @transform_2(%arg0: i32, %arg1: i32, %arg2: i32) -> (i32, i32) {
    %c0_i32 = arith.constant 0 : i32
    %c0_i32_0 = arith.constant 0 : i32
    return %c0_i32, %arg1 : i32, i32
  }
  func.func @transform_3(%arg0: i32, %arg1: i32, %arg2: i32) -> (i32, i32) {
    %c0_i32 = arith.constant 0 : i32
    return %arg0, %arg1 : i32, i32
  }
}

</mosaic_0001>

<llo_original>
// kernel: tpu_custom_call.1
$region0: #{tpu_custom_call.1}
  #allocation0 [shape = 'u32[]', space=smem, size = 0x4, offset = 0x4, fixed_abs, tag = 'smem constant byte address 0x4 - core index']
  #allocation1 [shape = 'u32[144,128]{1,0:T(1,128)}', space=vmem, size = 0x12000, scoped, tag = 'internal scratch']
  #allocation2 [shape = 'f32[16,300]{1,0:T(8,128)}', space=vmem, size = 0x6000, scoped, tag = 'scratch operand']
  %s0 = inlined_call_operand.hbm [shape: bf16[16,48], index: 0, kind: input, shape index: {}]
  %s1 = inlined_call_operand.hbm [shape: bf16[48,300], index: 1, kind: input, shape index: {}]
  %s2 = inlined_call_operand.vmem [shape: f32[1,300], index: 2, kind: input, shape index: {}]
  %s3 = inlined_call_operand.hbm [shape: bf16[16,300], index: 3, kind: output, shape index: {}]
  %s4 = sld [smem:[#allocation0]]
  $region38: #{tpu_custom_call.1} parent=0
    _
  %s6 = ssub.s32 1, %s4
  %s7 = scalar_select 0, %s6, %s4
  $region1: #{tpu_custom_call.1} parent=0
    #allocation3 [shape = 'u8[4096]{0}', space=vmem, size = 0x1000, scoped, tag = 'input window, operand 0, single buffered']
    #allocation4 [shape = 's32[1]{0}', space=sflag, size = 0x4, scoped, tag = 'scoped memory for tpu_custom_call.1']
    #allocation5 [shape = 's32[1]{0}', space=sflag, size = 0x4, scoped, tag = 'scoped memory for tpu_custom_call.1']
    #allocation6 [shape = 'u8[36864]{0}', space=vmem, size = 0x9000, scoped, tag = 'input window, operand 1, single buffered']
    #allocation7 [shape = 's32[1]{0}', space=sflag, size = 0x4, scoped, tag = 'scoped memory for tpu_custom_call.1']
    #allocation8 [shape = 'u8[12288]{0}', space=vmem, size = 0x3000, scoped, tag = 'output window, operand 0, single buffered']
    %8 = vsyncpa [#allocation4], 0
    %9 = vsyncpa [#allocation7], 0
    %10 = vsyncpa [#allocation5], 0
    // Predicated region
    $region2: #{tpu_custom_call.1} parent=1 // pred_check
      _
    $region3: #{tpu_custom_call.1} parent=1 // pred_check_branch
      %12 = sbr.rel (0) target = $region5
    $region4: #{tpu_custom_call.1} parent=1 // pred_region
      %s14 = ssub.s32 128, 128
      %15 = vsyncadd [#allocation4], %s14
      %s16 = sshll.u32 [#allocation3], 4
      %s17 = int_to_ptr.vmem [resolvable:$true] %s16
      %22 = dma.hbm_to_vmem [thread:$0]  %s0, 128, %s17, [#allocation4], 64, 64, 4
    $region5: #{tpu_custom_call.1} parent=1 // pred_fallthru
      _
    // Predicated region
    $region6: #{tpu_custom_call.1} parent=1 // pred_check
      _
    $region7: #{tpu_custom_call.1} parent=1 // pred_check_branch
      %24 = sbr.rel (0) target = $region9
    $region8: #{tpu_custom_call.1} parent=1 // pred_region
      %s26 = ssub.s32 1152, 1152
      %27 = vsyncadd [#allocation7], %s26
      %s28 = sshll.u32 [#allocation6], 4
      %s29 = int_to_ptr.vmem [resolvable:$true] %s28
      %34 = dma.hbm_to_vmem [thread:$0]  %s1, 1152, %s29, [#allocation7], 192, 192, 12
    $region9: #{tpu_custom_call.1} parent=1 // pred_fallthru
      _
    // Predicated region
    $region10: #{tpu_custom_call.1} parent=1 // pred_check
      _
    $region11: #{tpu_custom_call.1} parent=1 // pred_check_branch
      %36 = sbr.rel (0) target = $region13
    $region12: #{tpu_custom_call.1} parent=1 // pred_region
      _
    $region13: #{tpu_custom_call.1} parent=1 // pred_fallthru
      _
    // Predicated region
    $region14: #{tpu_custom_call.1} parent=1 // pred_check
      _
    $region15: #{tpu_custom_call.1} parent=1 // pred_check_branch
      %38 = sbr.rel (0) target = $region17
    $region16: #{tpu_custom_call.1} parent=1 // pred_region
      %39 = dma.done [#allocation4], 128
    $region17: #{tpu_custom_call.1} parent=1 // pred_fallthru
      _
    // Predicated region
    $region18: #{tpu_custom_call.1} parent=1 // pred_check
      _
    $region19: #{tpu_custom_call.1} parent=1 // pred_check_branch
      %41 = sbr.rel (0) target = $region21
    $region20: #{tpu_custom_call.1} parent=1 // pred_region
      %42 = dma.done [#allocation7], 1152
    $region21: #{tpu_custom_call.1} parent=1 // pred_fallthru
      _
    %p44 = scmp.eq.s32.totalorder 0, 0
    // Predicated region
    $region22: #{tpu_custom_call.1} parent=1 // pred_check
      %p45 = pneg %p44
    $region23: #{tpu_custom_call.1} parent=1 // pred_check_branch
      %47 = sbr.rel (%p45) target = $region25
    $region24: #{tpu_custom_call.1} parent=1 // pred_region
      %48 = vst [vmem:[#allocation2] sm:$0xff] 0.0
      %49 = vst [vmem:[#allocation2 + $0x8] sm:$0xff] 0.0
      %vm50 = vcmask 359424
      %51 = vst.msk [vmem:[#allocation2 + $0x10] sm:$0xff] %vm50, 0.0
      %52 = vst [vmem:[#allocation2 + $0x18] sm:$0xff] 0.0
      %53 = vst [vmem:[#allocation2 + $0x20] sm:$0xff] 0.0
      %54 = vst.msk [vmem:[#allocation2 + $0x28] sm:$0xff] %vm50, 0.0
    $region25: #{tpu_custom_call.1} parent=1 // pred_fallthru
      _
    %v55 = vld [vmem:[#allocation2] sm:$0xff]
    %v56 = vld [vmem:[#allocation2 + $0x8] sm:$0xff]
    %v57 = vld [vmem:[#allocation2 + $0x10] sm:$0xff]
    %v58 = vld [vmem:[#allocation2 + $0x18] sm:$0xff]
    %v59 = vld [vmem:[#allocation2 + $0x20] sm:$0xff]
    %v60 = vld [vmem:[#allocation2 + $0x28] sm:$0xff]
    %v61 = vld [vmem:[#allocation3] sm:$0xf]
    %v62 = vld [vmem:[#allocation3 + $0x4] sm:$0xf]
    %v63 = vld [vmem:[#allocation6] sm:$0xff]
    %v64 = vld [vmem:[#allocation6 + $0x8] sm:$0xf]
    %v65 = vld [vmem:[#allocation6 + $0xc] sm:$0xff]
    %v66 = vld [vmem:[#allocation6 + $0x14] sm:$0xf]
    %v67 = vld [vmem:[#allocation6 + $0x18] sm:$0xff]
    %v68 = vld [vmem:[#allocation6 + $0x20] sm:$0xf]
    %v69 = vld [vmem:[#allocation6 + $0x24] sm:$0xff]
    %v70 = vld [vmem:[#allocation6 + $0x2c] sm:$0xf]
    %v71 = vld [vmem:[#allocation6 + $0x30] sm:$0xff]
    %v72 = vld [vmem:[#allocation6 + $0x38] sm:$0xf]
    %v73 = vld [vmem:[#allocation6 + $0x3c] sm:$0xff]
    %v74 = vld [vmem:[#allocation6 + $0x44] sm:$0xf]
    %v77 = vunpack.c.l.b16 %v61
    %v78 = vunpack.c.l.b16 %v62
    %v79 = vpack.c.b16 %v78, %v77
    %v92 = vunpack.c.l.b16 %v63
    %v93 = vunpack.c.h.b16 %v63
    %v94 = vunpack.c.l.b16 %v64
    %v95 = vunpack.c.l.b16 %v65
    %v96 = vunpack.c.h.b16 %v65
    %v97 = vunpack.c.l.b16 %v66
    %v98 = vunpack.c.l.b16 %v67
    %v99 = vunpack.c.h.b16 %v67
    %v100 = vunpack.c.l.b16 %v68
    %v101 = vunpack.c.l.b16 %v69
    %v102 = vunpack.c.h.b16 %v69
    %v103 = vunpack.c.l.b16 %v70
    %v104 = vunpack.c.l.b16 %v71
    %v105 = vunpack.c.h.b16 %v71
    %v106 = vunpack.c.l.b16 %v72
    %v107 = vunpack.c.l.b16 %v73
    %v108 = vunpack.c.h.b16 %v73
    %v109 = vunpack.c.l.b16 %v74
    %v110 = vpack.c.b16 %v95, %v92
    %v111 = vpack.c.b16 %v96, %v93
    %v112 = vpack.c.b16 %v97, %v94
    %v113 = vpack.c.b16 %v101, %v98
    %v114 = vpack.c.b16 %v102, %v99
    %v115 = vpack.c.b16 %v103, %v100
    %v116 = vpack.c.b16 %v107, %v104
    %v117 = vpack.c.b16 %v108, %v105
    %v118 = vpack.c.b16 %v109, %v106
    %vm128 = vcmask 392192
    %v130 = vsel %vm128, %v79, 0
    %132 = vmatprep.subr.bf16.mxu0 0
    %133 = vmatpush1.bf16.msra.mxu0 0
    %134 = vmatprep.subr.bf16.mxu0 0
    %135 = vmatpush1.bf16.msra.mxu0 0
    %136 = vmatprep.subr.bf16.mxu0 0
    %137 = vmatpush1.bf16.msra.mxu0 0
    %138 = vmatprep.subr.bf16.mxu0 0
    %139 = vmatpush1.bf16.msra.mxu0 0
    %140 = vmatprep.subr.bf16.mxu0 0
    %141 = vmatpush1.bf16.msra.mxu0 0
    %142 = vmatprep.subr.bf16.mxu0 %v117
    %143 = vmatpush1.bf16.msra.mxu0 %v116
    %144 = vmatprep.subr.bf16.mxu0 %v114
    %145 = vmatpush1.bf16.msra.mxu0 %v113
    %146 = vmatprep.subr.bf16.mxu0 %v111
    %147 = vmatpush1.bf16.msra.mxu0 %v110
    %148 = vmatprep.subr.bf16.mxu0 0
    %149 = vmatpush2.bf16.msra.mxu0 0
    %150 = vmatprep.subr.bf16.mxu0 0
    %151 = vmatpush2.bf16.msra.mxu0 0
    %152 = vmatprep.subr.bf16.mxu0 0
    %153 = vmatpush2.bf16.msra.mxu0 0
    %154 = vmatprep.subr.bf16.mxu0 0
    %155 = vmatpush2.bf16.msra.mxu0 0
    %156 = vmatprep.subr.bf16.mxu0 0
    %157 = vmatpush2.bf16.msra.mxu0 0
    %158 = vmatprep.subr.bf16.mxu0 0
    %159 = vmatpush2.bf16.msra.mxu0 0
    %160 = vmatprep.subr.bf16.mxu0 0
    %161 = vmatpush2.bf16.msra.mxu0 0
    %162 = vmatprep.subr.bf16.mxu0 0
    %163 = vmatpush2.bf16.msra.mxu0 0
    %164 = vmatprep.mubr.bf16.mxu0 0
    %165 = vmatmul.mubr.bf16.gmra.mxu0 %v130
    %v166 = vpop.f32.mrf.mxu0
    %v167 = vadd.f32 0.0, %v166
    %v168 = vpop.f32.mrf.mxu0
    %v169 = vadd.f32 0.0, %v168
    %v170 = vpop.f32.mrf.mxu0
    %v171 = vadd.f32 0.0, %v170
    %v172 = vpop.f32.mrf.mxu0
    %v173 = vadd.f32 0.0, %v172
    %174 = vdwg.mxu0
    %175 = vmatprep.subr.bf16.mxu0 0
    %176 = vmatpush1.bf16.msra.mxu0 0
    %177 = vmatprep.subr.bf16.mxu0 0
    %178 = vmatpush1.bf16.msra.mxu0 0
    %179 = vmatprep.subr.bf16.mxu0 0
    %180 = vmatpush1.bf16.msra.mxu0 0
    %181 = vmatprep.subr.bf16.mxu0 0
    %182 = vmatpush1.bf16.msra.mxu0 0
    %183 = vmatprep.subr.bf16.mxu0 0
    %184 = vmatpush1.bf16.msra.mxu0 0
    %185 = vmatprep.subr.bf16.mxu0 0
    %186 = vmatpush1.bf16.msra.mxu0 %v118
    %187 = vmatprep.subr.bf16.mxu0 0
    %188 = vmatpush1.bf16.msra.mxu0 %v115
    %189 = vmatprep.subr.bf16.mxu0 0
    %190 = vmatpush1.bf16.msra.mxu0 %v112
    %191 = vmatprep.subr.bf16.mxu0 0
    %192 = vmatpush2.bf16.msra.mxu0 0
    %193 = vmatprep.subr.bf16.mxu0 0
    %194 = vmatpush2.bf16.msra.mxu0 0
    %195 = vmatprep.subr.bf16.mxu0 0
    %196 = vmatpush2.bf16.msra.mxu0 0
    %197 = vmatprep.subr.bf16.mxu0 0
    %198 = vmatpush2.bf16.msra.mxu0 0
    %199 = vmatprep.subr.bf16.mxu0 0
    %200 = vmatpush2.bf16.msra.mxu0 0
    %201 = vmatprep.subr.bf16.mxu0 0
    %202 = vmatpush2.bf16.msra.mxu0 0
    %203 = vmatprep.subr.bf16.mxu0 0
    %204 = vmatpush2.bf16.msra.mxu0 0
    %205 = vmatprep.subr.bf16.mxu0 0
    %206 = vmatpush2.bf16.msra.mxu0 0
    %207 = vmatprep.mubr.bf16.mxu0 0
    %208 = vmatmul.mubr.bf16.gmra.mxu0 %v130
    %v209 = vpop.f32.mrf.mxu0
    %v210 = vadd.f32 0.0, %v209
    %v211 = vpop.f32.mrf.mxu0
    %v212 = vpop.f32.mrf.mxu0
    %v213 = vadd.f32 0.0, %v212
    %v214 = vpop.f32.mrf.mxu0
    %215 = vdwg.mxu0
    %v216 = vadd.f32 %v55, %v167
    %v217 = vadd.f32 %v56, %v169
    %v218 = vadd.f32 %v57, %v210
    %v219 = vadd.f32 %v58, %v171
    %v220 = vadd.f32 %v59, %v173
    %v221 = vadd.f32 %v60, %v213
    %222 = vst [vmem:[#allocation2] sm:$0xff] %v216
    %223 = vst [vmem:[#allocation2 + $0x8] sm:$0xff] %v217
    %vm224 = vcmask 359424
    %225 = vst.msk [vmem:[#allocation2 + $0x10] sm:$0xff] %vm224, %v218
    %226 = vst [vmem:[#allocation2 + $0x18] sm:$0xff] %v219
    %227 = vst [vmem:[#allocation2 + $0x20] sm:$0xff] %v220
    %228 = vst.msk [vmem:[#allocation2 + $0x28] sm:$0xff] %vm224, %v221
    // Predicated region
    $region26: #{tpu_custom_call.1} parent=1 // pred_check
      %p229 = pneg %p44
    $region27: #{tpu_custom_call.1} parent=1 // pred_check_branch
      %231 = sbr.rel (%p229) target = $region29
    $region28: #{tpu_custom_call.1} parent=1 // pred_region
      %v232 = vld [vmem:[#allocation2] sm:$0xff]
      %v233 = vld [vmem:[#allocation2 + $0x8] sm:$0xff]
      %v234 = vld [vmem:[#allocation2 + $0x10] sm:$0xff]
      %v235 = vld [vmem:[#allocation2 + $0x18] sm:$0xff]
      %v236 = vld [vmem:[#allocation2 + $0x20] sm:$0xff]
      %v237 = vld [vmem:[#allocation2 + $0x28] sm:$0xff]
      %v238 = vld [vmem:[%s2] sm:$0x7]
      %v240 = vlaneseq
      %v241 = vshrl.u32 %v240, 7
      %v242 = vsub.s32 0, %v241
      %v243 = vrot.slane %v238, %v242
      %v244 = vlaneseq
      %v245 = vshrl.u32 %v244, 7
      %v246 = vsub.s32 1, %v245
      %v247 = vrot.slane %v238, %v246
      %v248 = vlaneseq
      %v249 = vshrl.u32 %v248, 7
      %v250 = vsub.s32 2, %v249
      %v251 = vrot.slane %v238, %v250
      %v255 = vadd.f32 %v232, %v243
      %v256 = vadd.f32 %v233, %v247
      %v257 = vadd.f32 %v234, %v251
      %v258 = vadd.f32 %v235, %v243
      %v259 = vadd.f32 %v236, %v247
      %v260 = vadd.f32 %v237, %v251
      %v261 = vpack.c.bf16 %v258, %v255
      %v262 = vpack.c.bf16 %v259, %v256
      %v263 = vpack.c.bf16 %v260, %v257
      %v267 = vunpack.c.l.b16 %v261
      %v268 = vunpack.c.l.b16 %v262
      %v269 = vunpack.c.l.b16 %v263
      %v270 = vunpack.c.h.b16 %v261
      %v271 = vunpack.c.h.b16 %v262
      %v272 = vunpack.c.h.b16 %v263
      %v273 = vpack.c.b16 %v268, %v267
      %v274 = vpack.c.b16 %v269, %v269
      %v275 = vpack.c.b16 %v271, %v270
      %v276 = vpack.c.b16 %v272, %v272
      %281 = vst [vmem:[#allocation8] sm:$0xff] %v273
      %vm282 = vcmask 355328
      %283 = vst.msk [vmem:[#allocation8 + $0x8] sm:$0xf] %vm282, %v274
      %284 = vst [vmem:[#allocation8 + $0xc] sm:$0xff] %v275
      %285 = vst.msk [vmem:[#allocation8 + $0x14] sm:$0xf] %vm282, %v276
    $region29: #{tpu_custom_call.1} parent=1 // pred_fallthru
      _
    // Predicated region
    $region30: #{tpu_custom_call.1} parent=1 // pred_check
      _
    $region31: #{tpu_custom_call.1} parent=1 // pred_check_branch
      %287 = sbr.rel (0) target = $region33
    $region32: #{tpu_custom_call.1} parent=1 // pred_region
      %s289 = ssub.s32 384, 384
      %290 = vsyncadd [#allocation5], %s289
      %s291 = sshll.u32 [#allocation8], 4
      %s292 = int_to_ptr.vmem [resolvable:$true] %s291
      %297 = dma.vmem_to_hbm [thread:$0]  %s292, 384, %s3, [#allocation5], 192, 192, 12
    $region33: #{tpu_custom_call.1} parent=1 // pred_fallthru
      _
    // Predicated region
    $region34: #{tpu_custom_call.1} parent=1 // pred_check
      _
    $region35: #{tpu_custom_call.1} parent=1 // pred_check_branch
      %299 = sbr.rel (0) target = $region37
    $region36: #{tpu_custom_call.1} parent=1 // pred_region
      %300 = dma.done [#allocation5], 384
    $region37: #{tpu_custom_call.1} parent=1 // pred_fallthru
      _
    %301 = vsyncpa [#allocation4], 1
    %302 = vsyncpa [#allocation7], 1
    %303 = vsyncpa [#allocation5], 1

</llo_original>
